<compile_context>
chip_gen: v7x
topology: tpu7x:2x2x1
jax: 0.10.0
libtpu: 0.0.40
codegen_flags: <defaults>
</compile_context>

<pallas_src>
import jax
import jax.numpy as jnp
from jax.experimental import pallas as pl
from jax.experimental.pallas import tpu as pltpu


def _round_up(a: int, m: int) -> int:
    return ((a + m - 1) // m) * m


def _vmem_capacity_bytes() -> int:
    try:
        return int(pltpu.get_tpu_info().vmem_capacity_bytes)
    except Exception:
        return 64 << 20  # conservative default (v7x per-core VMEM)


# ---------------------------------------------------------------------------
# Kernels
# ---------------------------------------------------------------------------
def _csl_kernel(x_ref, w_ref, gate_ref, cbias_ref, o_ref):
    # x_ref     : (1, TN, Din)  MXU operand dtype (bf16 or f32)
    # w_ref     : (Din, TD)     MXU operand dtype
    # gate_ref  : (1, 1, TD)    f32, per-batch gate (precomputed in wrapper)
    # cbias_ref : (1, 1, TD)    f32, per-batch combined bias (b*gate + hbias)
    # o_ref     : (1, TN, TD)   output dtype
    y = jnp.dot(x_ref[0], w_ref[...], preferred_element_type=jnp.float32)
    o_ref[0] = (y * gate_ref[0] + cbias_ref[0]).astype(o_ref.dtype)


def _csl_kernel_ksplit(x_ref, w_ref, gate_ref, cbias_ref, o_ref, acc_ref):
    # Same as above, but dim_in is split along the last grid axis; partial
    # products accumulate into an f32 VMEM scratch (init/finalize via pl.when).
    k = pl.program_id(3)

    @pl.when(k == 0)
    def _():
        acc_ref[...] = jnp.zeros_like(acc_ref)

    acc_ref[...] += jnp.dot(x_ref[0], w_ref[...],
                            preferred_element_type=jnp.float32)

    @pl.when(k == pl.num_programs(3) - 1)
    def _():
        o_ref[0] = (acc_ref[...] * gate_ref[0] + cbias_ref[0]).astype(o_ref.dtype)


# ---------------------------------------------------------------------------
# Parameter preparation (done once, NOT per forward call)
# ---------------------------------------------------------------------------
def prepare_params(w, b, wg, bg, wb, mxu_dtype=jnp.bfloat16):
    """Pad all output-feature dims to a multiple of 128 once and cast the main
    weight to the MXU operand dtype.  Padded columns are exact zeros."""
    _, Dout = w.shape
    Dpad = _round_up(max(Dout, 128), 128)
    pad = Dpad - Dout
    if pad:
        w = jnp.pad(w, ((0, 0), (0, pad)))
        b = jnp.pad(b, ((0, pad),))
        wg = jnp.pad(wg, ((0, 0), (0, pad)))
        bg = jnp.pad(bg, ((0, pad),))
        wb = jnp.pad(wb, ((0, 0), (0, pad)))
    return dict(
        w=w.astype(mxu_dtype),
        b=b.astype(jnp.float32),
        wg=wg.astype(jnp.float32),
        bg=bg.astype(jnp.float32),
        wb=wb.astype(jnp.float32),
        dim_out=Dout,
        mxu_dtype=mxu_dtype,
    )


# ---------------------------------------------------------------------------
# Forward
# ---------------------------------------------------------------------------
def concat_scale_linear(context, x, params):
    """context: (B, 1+dim_c), x: (B, N, dim_in) -> (B, N, dim_out)."""
    w = params["w"]                       # (Din, Dpad), MXU operand dtype
    Din, Dpad = w.shape
    Dout = params["dim_out"]
    op_dtype = params["mxu_dtype"]
    B, N, Din_x = x.shape
    assert Din_x == Din
    out_dtype = x.dtype

    # ---- Hyper-network: degenerate M=1/K=1+dim_c GEMMs, leave to XLA -------
    gate = (context @ params["wg"] + params["bg"][None, :]).astype(jnp.float32)
    hbias = (context @ params["wb"]).astype(jnp.float32)
    # Fold main bias: (x@w + b)*gate + hbias == (x@w)*gate + (b*gate + hbias)
    cbias = params["b"][None, :] * gate + hbias
    gate3 = gate[:, None, :]              # (B, 1, Dpad)  f32
    cbias3 = cbias[:, None, :]            # (B, 1, Dpad)  f32

    x_op = x.astype(op_dtype)

    # ---- Generation-aware tile sizes ---------------------------------------
    op_bytes = jnp.finfo(op_dtype).bits // 8
    out_bytes = x.dtype.itemsize
    sub = 16 if op_bytes == 2 else 8      # bf16 packs 2 rows per 32-bit sublane
    vmem_cap = _vmem_capacity_bytes()
    budget = int(0.40 * vmem_cap)         # tile footprint cap incl. 2x buffering

    TD = min(Dpad, 1024)                  # lane dim of output, multiple of 128
    TN = min(_round_up(N, sub), 512)      # sublane dim

    # K (dim_in) split only for large dim_in; require exact tiling so the
    # accumulation never touches out-of-bounds garbage.
    TK = Din
    if Din > 2048:
        for cand in range(2048, 127, -128):
            if Din % cand == 0:
                TK = cand
                break
        # TODO(synk): if no 128-multiple divisor of dim_in exists, pad dim_in
        # once at init instead of falling back to the full-K tile.

    def footprint(tn, tk, td):
        # double-buffered x / w / out tiles + gate/cbias + f32 accumulator
        return (2 * (tn * tk * op_bytes + tk * td * op_bytes + tn * td * out_bytes)
                + 2 * 2 * td * 4 + tn * td * 4)

    while footprint(TN, TK, TD) > budget:
        if TD > 128:
            TD = max(128, (TD // 2) // 128 * 128)
        elif TN > sub:
            TN = max(sub, (TN // 2) // sub * sub)
        elif TK > 256 and TK % 256 == 0:
            TK //= 2
        else:
            break

    nD = pl.cdiv(Dpad, TD)
    nN = pl.cdiv(N, TN)
    nK = pl.cdiv(Din, TK)

    # ---- Grid order: keep the heavier operand resident ---------------------
    #   x-resident (Dout tiles innermost): x read once, w re-read nN times
    #   w-resident (row tiles innermost) : w read once, x re-read nD times
    x_resident = (N + nN * Dpad) <= (Dpad + nD * N)
    if x_resident:
        grid_core = (nN, nD)
        def _n(i0, i1): return i0
        def _d(i0, i1): return i1
    else:
        grid_core = (nD, nN)
        def _n(i0, i1): return i1
        def _d(i0, i1): return i0

    if nK == 1:
        kernel = _csl_kernel
        grid = (B,) + grid_core
        in_specs = [
            pl.BlockSpec((1, TN, TK), lambda b, i0, i1: (b, _n(i0, i1), 0)),
            pl.BlockSpec((TK, TD),    lambda b, i0, i1: (0, _d(i0, i1))),
            pl.BlockSpec((1, 1, TD),  lambda b, i0, i1: (b, 0, _d(i0, i1))),
            pl.BlockSpec((1, 1, TD),  lambda b, i0, i1: (b, 0, _d(i0, i1))),
        ]
        out_specs = pl.BlockSpec(
            (1, TN, TD), lambda b, i0, i1: (b, _n(i0, i1), _d(i0, i1)))
        scratch_shapes = []
        semantics = ("parallel", "parallel", "parallel")
    else:
        kernel = _csl_kernel_ksplit
        grid = (B,) + grid_core + (nK,)
        in_specs = [
            pl.BlockSpec((1, TN, TK), lambda b, i0, i1, k: (b, _n(i0, i1), k)),
            pl.BlockSpec((TK, TD),    lambda b, i0, i1, k: (k, _d(i0, i1))),
            pl.BlockSpec((1, 1, TD),  lambda b, i0, i1, k: (b, 0, _d(i0, i1))),
            pl.BlockSpec((1, 1, TD),  lambda b, i0, i1, k: (b, 0, _d(i0, i1))),
        ]
        out_specs = pl.BlockSpec(
            (1, TN, TD), lambda b, i0, i1, k: (b, _n(i0, i1), _d(i0, i1)))
        scratch_shapes = [pltpu.VMEM((TN, TD), jnp.float32)]
        semantics = ("parallel", "parallel", "parallel", "arbitrary")

    # Scoped VMEM sized from the actual tile footprint (+headroom), clamped to
    # the chip's physical capacity.
    vmem_limit = int(1.5 * footprint(TN, TK, TD)) + (8 << 20)
    vmem_limit = max(16 << 20, min(vmem_limit, int(0.9 * vmem_cap)))

    out = pl.pallas_call(
        kernel,
        out_shape=jax.ShapeDtypeStruct((B, N, Dpad), out_dtype),
        grid_spec=pltpu.PrefetchScalarGridSpec(
            num_scalar_prefetch=0,
            grid=grid,
            in_specs=in_specs,
            out_specs=out_specs,
            scratch_shapes=scratch_shapes),
        compiler_params=pltpu.CompilerParams(
            dimension_semantics=semantics,
            vmem_limit_bytes=vmem_limit),
    )(x_op, w, gate3, cbias3)

    if Dpad != Dout:
        out = out[..., :Dout]
    return out


def _reference(context, x, w, b, wg, bg, wb):
    gate = context @ wg + bg                       # (B, Dout)
    hbias = context @ wb                           # (B, Dout)
    y = jnp.einsum('bnd,de->bne', x, w) + b        # (B, N, Dout)
    return y * gate[:, None, :] + hbias[:, None, :]


if __name__ == "__main__":
    # Small shapes consistent with the module.
    B, N = 2, 16          # batch, number of points (x is 3-D: B x N x dim_in)
    dim_in, dim_out, dim_c = 32, 32, 4
    C1 = 1 + dim_c

    key = jax.random.PRNGKey(0)
    ks = jax.random.split(key, 8)

    # Deterministic init mimicking nn.Linear's U(-1/sqrt(fan_in), 1/sqrt(fan_in)).
    def uinit(k, shape, fan_in):
        bound = 1.0 / jnp.sqrt(fan_in)
        return jax.random.uniform(k, shape, jnp.float32, -bound, bound)

    w = uinit(ks[0], (dim_in, dim_out), dim_in)      # _layer.weight (stored (in,out))
    b = uinit(ks[1], (dim_out,), dim_in)             # _layer.bias
    wb = uinit(ks[2], (C1, dim_out), C1)             # _hyper_bias.weight (no bias)
    wg = uinit(ks[3], (C1, dim_out), C1)             # _hyper_gate.weight
    bg = uinit(ks[4], (dim_out,), C1)                # _hyper_gate.bias

    context = jax.random.normal(ks[5], (B, C1), jnp.float32)
    x = jax.random.normal(ks[6], (B, N, dim_in), jnp.float32)

    ref = _reference(context, x, w, b, wg, bg, wb)

    # f32 operand path: tight parity with the reference.
    params_f32 = prepare_params(w, b, wg, bg, wb, mxu_dtype=jnp.float32)
    out_f32 = jax.block_until_ready(concat_scale_linear(context, x, params_f32))
    assert out_f32.shape == (B, N, dim_out)
    assert jnp.allclose(out_f32, ref, atol=1e-4, rtol=1e-4), "f32 mismatch vs reference"

    # bf16 operand path (default / fast): bf16 MXU operands, f32 accumulation.
    params_bf16 = prepare_params(w, b, wg, bg, wb)   # mxu_dtype=bfloat16
    out_bf16 = jax.block_until_ready(concat_scale_linear(context, x, params_bf16))
    assert out_bf16.shape == (B, N, dim_out)
    assert jnp.allclose(out_bf16, ref, atol=2e-2, rtol=2e-2), "bf16 mismatch vs reference"

    print("KERNEL_OK")
</pallas_src>

<mosaic_0001>
module attributes {stable_mosaic.version = 11 : i64} {
  func.func @_csl_kernel(%arg0: i32, %arg1: i32, %arg2: i32, %arg3: memref<1x16x32xf32, #tpu.memory_space<vmem>>, %arg4: memref<32x128xf32, #tpu.memory_space<vmem>>, %arg5: memref<1x1x128xf32, #tpu.memory_space<vmem>>, %arg6: memref<1x1x128xf32, #tpu.memory_space<vmem>>, %arg7: memref<1x16x128xf32, #tpu.memory_space<vmem>>) attributes {dimension_semantics = [#tpu.dimension_semantics<parallel>, #tpu.dimension_semantics<parallel>, #tpu.dimension_semantics<parallel>], iteration_bounds = array<i64: 2, 1, 1>, scalar_prefetch = 0 : i64, scratch_operands = 0 : i64, tpu.core_type = #tpu.core_type<tc>, window_params = [{transform_indices = @transform_0, window_bounds = array<i64: 1, 16, 32>}, {transform_indices = @transform_1, window_bounds = array<i64: 32, 128>}, {transform_indices = @transform_2, window_bounds = array<i64: 1, 1, 128>}, {transform_indices = @transform_3, window_bounds = array<i64: 1, 1, 128>}, {transform_indices = @transform_4, window_bounds = array<i64: 1, 16, 128>}]} {
    %c0 = arith.constant 0 : index
    %c0_0 = arith.constant 0 : index
    %c0_1 = arith.constant 0 : index
    %0 = vector.load %arg3[%c0, %c0_0, %c0_1] : memref<1x16x32xf32, #tpu.memory_space<vmem>>, vector<1x16x32xf32>
    %1 = vector.shape_cast %0 : vector<1x16x32xf32> to vector<16x32xf32>
    %c0_2 = arith.constant 0 : index
    %c0_3 = arith.constant 0 : index
    %2 = vector.load %arg4[%c0_2, %c0_3] : memref<32x128xf32, #tpu.memory_space<vmem>>, vector<32x128xf32>
    %cst = arith.constant dense<0.000000e+00> : vector<16x128xf32>
    %3 = tpu.matmul %1, %2, %cst {dimension_numbers = #tpu.dot_dimension_numbers<[1], [0], [0], [1], [0, 0, 1, 1], [], []>} : vector<16x32xf32>, vector<32x128xf32>, vector<16x128xf32> -> vector<16x128xf32>
    %c0_4 = arith.constant 0 : index
    %c0_5 = arith.constant 0 : index
    %c0_6 = arith.constant 0 : index
    %4 = vector.load %arg5[%c0_4, %c0_5, %c0_6] : memref<1x1x128xf32, #tpu.memory_space<vmem>>, vector<1x1x128xf32>
    %5 = vector.shape_cast %4 : vector<1x1x128xf32> to vector<1x128xf32>
    %6 = vector.broadcast %5 : vector<1x128xf32> to vector<16x128xf32>
    %7 = arith.mulf %3, %6 : vector<16x128xf32>
    %c0_7 = arith.constant 0 : index
    %c0_8 = arith.constant 0 : index
    %c0_9 = arith.constant 0 : index
    %8 = vector.load %arg6[%c0_7, %c0_8, %c0_9] : memref<1x1x128xf32, #tpu.memory_space<vmem>>, vector<1x1x128xf32>
    %9 = vector.shape_cast %8 : vector<1x1x128xf32> to vector<1x128xf32>
    %10 = vector.broadcast %9 : vector<1x128xf32> to vector<16x128xf32>
    %11 = arith.addf %7, %10 : vector<16x128xf32>
    %c0_10 = arith.constant 0 : index
    %c0_11 = arith.constant 0 : index
    %c0_12 = arith.constant 0 : index
    %12 = vector.load %arg7[%c0_10, %c0_11, %c0_12] : memref<1x16x128xf32, #tpu.memory_space<vmem>>, vector<1x16x128xf32>
    %13 = vector.shape_cast %12 : vector<1x16x128xf32> to vector<16x128xf32>
    %14 = vector.shape_cast %11 : vector<16x128xf32> to vector<1x16x128xf32>
    tpu.vector_store %arg7[%c0_10, %c0_11, %c0_12], %14 {strides = array<i32>} : memref<1x16x128xf32, #tpu.memory_space<vmem>>, vector<1x16x128xf32>,
    return
  }
  func.func @transform_0(%arg0: i32, %arg1: i32, %arg2: i32) -> (i32, i32, i32) {
    %c0_i32 = arith.constant 0 : i32
    %c0_i32_0 = arith.constant 0 : i32
    return %arg0, %arg1, %c0_i32 : i32, i32, i32
  }
  func.func @transform_1(%arg0: i32, %arg1: i32, %arg2: i32) -> (i32, i32) {
    %c0_i32 = arith.constant 0 : i32
    %c0_i32_0 = arith.constant 0 : i32
    return %c0_i32, %arg2 : i32, i32
  }
  func.func @transform_2(%arg0: i32, %arg1: i32, %arg2: i32) -> (i32, i32, i32) {
    %c0_i32 = arith.constant 0 : i32
    %c0_i32_0 = arith.constant 0 : i32
    return %arg0, %c0_i32, %arg2 : i32, i32, i32
  }
  func.func @transform_3(%arg0: i32, %arg1: i32, %arg2: i32) -> (i32, i32, i32) {
    %c0_i32 = arith.constant 0 : i32
    %c0_i32_0 = arith.constant 0 : i32
    return %arg0, %c0_i32, %arg2 : i32, i32, i32
  }
  func.func @transform_4(%arg0: i32, %arg1: i32, %arg2: i32) -> (i32, i32, i32) {
    %c0_i32 = arith.constant 0 : i32
    return %arg0, %arg1, %arg2 : i32, i32, i32
  }
}

</mosaic_0001>

<llo_original>
// kernel: tpu_custom_call.1
$region0: #{tpu_custom_call.1}
  #allocation0 [shape = 'u32[]', space=smem, size = 0x4, offset = 0x4, fixed_abs, tag = 'smem constant byte address 0x4 - core index']
  #allocation1 [shape = 'u32[144,128]{1,0:T(1,128)}', space=vmem, size = 0x12000, scoped, tag = 'internal scratch']
  %s0 = inlined_call_operand.hbm [shape: f32[2,16,32], index: 0, kind: input, shape index: {}]
  %s1 = inlined_call_operand.hbm [shape: f32[32,128], index: 1, kind: input, shape index: {}]
  %s2 = inlined_call_operand.vmem [shape: f32[2,1,128], index: 2, kind: input, shape index: {}]
  %s3 = inlined_call_operand.vmem [shape: f32[2,1,128], index: 3, kind: input, shape index: {}]
  %s4 = inlined_call_operand.hbm [shape: f32[2,16,128], index: 4, kind: output, shape index: {}]
  %s5 = sld [smem:[#allocation0]]
  $region57: #{tpu_custom_call.1} parent=0
    _
  %s7 = ssub.s32 1, %s5
  %s8 = scalar_select 0, %s7, %s5
  $region1: #{tpu_custom_call.1} parent=0
    #allocation2 [shape = 'u8[16384]{0}', space=vmem, size = 0x4000, scoped, tag = 'input window, operand 0']
    #allocation3 [shape = 's32[2]{0}', space=sflag, size = 0x8, scoped, tag = 'scoped memory for tpu_custom_call.1']
    #allocation4 [shape = 's32[2]{0}', space=sflag, size = 0x8, scoped, tag = 'scoped memory for tpu_custom_call.1']
    #allocation5 [shape = 'u8[16384]{0}', space=vmem, size = 0x4000, scoped, tag = 'input window, operand 1, single buffered']
    #allocation6 [shape = 's32[1]{0}', space=sflag, size = 0x4, scoped, tag = 'scoped memory for tpu_custom_call.1']
    #allocation7 [shape = 'u8[16384]{0}', space=vmem, size = 0x4000, scoped, tag = 'output window, operand 0']
    %9 = vsyncpa [#allocation3], 0
    %s10 = scalar_lea.sflag [#allocation3], 1
    %11 = vsyncpa %s10, 0
    %12 = vsyncpa [#allocation6], 0
    %13 = vsyncpa [#allocation4], 0
    %s14 = scalar_lea.sflag [#allocation4], 1
    %15 = vsyncpa %s14, 0
    loop: start=0, step=1, limit=4
    $region2: #{tpu_custom_call.1} parent=1 // loop_pre_header
      _
    $region3: #{tpu_custom_call.1} parent=1 // loop_header
      %s17 = sphi 0, %s21
      %p18 = scmp.ge.s32.totalorder %s17, 4
      %s24 = sphi 0, %s43
      %s25 = sphi 0, %s39
      %s26 = sphi 0, %s35
      %s27 = sphi 0, %s24
      %s28 = sphi 0, %s25
      %s29 = sphi 0, %s26
      %s30 = sphi 0, %s27
      %s31 = sphi 0, %s28
      %s32 = sphi 0, %s29
      %s48 = sphi 0, %s50
      %s51 = sphi 0, %s48
      %s52 = sphi 0, %s51
      %s68 = sphi 0, %s52
      %s74 = sphi 0, %s76
      %s77 = sphi 0, %s74
      %s78 = sphi 0, %s77
      %s94 = sphi 0, %s78
      %s102 = sphi 0, %s104
      %s105 = sphi 0, %s102
      %s106 = sphi 0, %s105
      %s122 = sphi 0, %s106
      %s130 = sphi 0, %s132
      %s133 = sphi 0, %s130
      %s134 = sphi 0, %s133
      %s150 = sphi 0, %s134
      %s160 = sphi 0, %s162
      %s163 = sphi 0, %s160
      %s164 = sphi 0, %s163
      %s180 = sphi 0, %s164
    $region4: #{tpu_custom_call.1} parent=1 // loop_header_branch
      %20 = sbr.rel (%p18) target = $region8
    $region5: #{tpu_custom_call.1} parent=1 // loop_body
      %s22 = ssub.s32 %s17, 1
      %s23 = ssub.s32 %s17, 2
      %s33 = sadd.s32 1, %s26
      %p34 = scmp.ge.s32.totalorder %s33, 1
      %s35 = scalar_select %p34, 0, %s33
      %s36 = sadd.s32 1, %s25
      %s37 = scalar_select %p34, %s36, %s25
      %p38 = scmp.ge.s32.totalorder %s37, 1
      %s39 = scalar_select %p38, 0, %s37
      %s40 = sadd.s32 1, %s24
      %s41 = scalar_select %p38, %s40, %s24
      %p42 = scmp.ge.s32.totalorder %s41, 2
      %s43 = scalar_select %p42, 0, %s41
      %s44 = ssub.s32 %s24, %s43
      %s45 = ssub.s32 %s25, %s39
      %s46 = sor.u32 %s44, %s45
      %p47 = scmp.eq.s32.totalorder %s46, 0
      %s49 = sadd.s32 %s48, 1
      %s50 = scalar_select %p47, %s48, %s49
      %p53 = pneg %p47
      %p54 = scmp.eq.s32.totalorder %s17, 1
      %p55 = por %p53, %p54
      %p56 = scmp.ne.s32.totalorder %s48, %s51
      %p57 = scmp.eq.s32.totalorder %s17, 0
      %p58 = por %p56, %p57
      %p59 = scmp.ne.s32.totalorder %s48, %s51
      %p60 = scmp.eq.s32.totalorder %s22, 1
      %p61 = por %p59, %p60
      %p62 = scmp.ne.s32.totalorder %s51, %s52
      %p63 = scmp.eq.s32.totalorder %s22, 0
      %p64 = por %p62, %p63
      %p65 = scmp.ne.s32.totalorder %s51, %s52
      %p66 = scmp.eq.s32.totalorder %s23, 1
      %p67 = por %p65, %p66
      %p69 = scmp.ne.s32.totalorder %s52, %s68
      %p70 = scmp.eq.s32.totalorder %s23, 0
      %p71 = por %p69, %p70
      %s72 = ssub.s32 %s26, %s35
      %p73 = scmp.eq.s32.totalorder %s72, 0
      %s75 = sadd.s32 %s74, 1
      %s76 = scalar_select %p73, %s74, %s75
      %p79 = pneg %p73
      %p80 = scmp.eq.s32.totalorder %s17, 1
      %p81 = por %p79, %p80
      %p82 = scmp.ne.s32.totalorder %s74, %s77
      %p83 = scmp.eq.s32.totalorder %s17, 0
      %p84 = por %p82, %p83
      %p85 = scmp.ne.s32.totalorder %s74, %s77
      %p86 = scmp.eq.s32.totalorder %s22, 1
      %p87 = por %p85, %p86
      %p88 = scmp.ne.s32.totalorder %s77, %s78
      %p89 = scmp.eq.s32.totalorder %s22, 0
      %p90 = por %p88, %p89
      %p91 = scmp.ne.s32.totalorder %s77, %s78
      %p92 = scmp.eq.s32.totalorder %s23, 1
      %p93 = por %p91, %p92
      %p95 = scmp.ne.s32.totalorder %s78, %s94
      %p96 = scmp.eq.s32.totalorder %s23, 0
      %p97 = por %p95, %p96
      %s98 = ssub.s32 %s24, %s43
      %s99 = ssub.s32 %s26, %s35
      %s100 = sor.u32 %s98, %s99
      %p101 = scmp.eq.s32.totalorder %s100, 0
      %s103 = sadd.s32 %s102, 1
      %s104 = scalar_select %p101, %s102, %s103
      %p107 = pneg %p101
      %p108 = scmp.eq.s32.totalorder %s17, 1
      %p109 = por %p107, %p108
      %p110 = scmp.ne.s32.totalorder %s102, %s105
      %p111 = scmp.eq.s32.totalorder %s17, 0
      %p112 = por %p110, %p111
      %p113 = scmp.ne.s32.totalorder %s102, %s105
      %p114 = scmp.eq.s32.totalorder %s22, 1
      %p115 = por %p113, %p114
      %p116 = scmp.ne.s32.totalorder %s105, %s106
      %p117 = scmp.eq.s32.totalorder %s22, 0
      %p118 = por %p116, %p117
      %p119 = scmp.ne.s32.totalorder %s105, %s106
      %p120 = scmp.eq.s32.totalorder %s23, 1
      %p121 = por %p119, %p120
      %p123 = scmp.ne.s32.totalorder %s106, %s122
      %p124 = scmp.eq.s32.totalorder %s23, 0
      %p125 = por %p123, %p124
      %s126 = ssub.s32 %s24, %s43
      %s127 = ssub.s32 %s26, %s35
      %s128 = sor.u32 %s126, %s127
      %p129 = scmp.eq.s32.totalorder %s128, 0
      %s131 = sadd.s32 %s130, 1
      %s132 = scalar_select %p129, %s130, %s131
      %p135 = pneg %p129
      %p136 = scmp.eq.s32.totalorder %s17, 1
      %p137 = por %p135, %p136
      %p138 = scmp.ne.s32.totalorder %s130, %s133
      %p139 = scmp.eq.s32.totalorder %s17, 0
      %p140 = por %p138, %p139
      %p141 = scmp.ne.s32.totalorder %s130, %s133
      %p142 = scmp.eq.s32.totalorder %s22, 1
      %p143 = por %p141, %p142
      %p144 = scmp.ne.s32.totalorder %s133, %s134
      %p145 = scmp.eq.s32.totalorder %s22, 0
      %p146 = por %p144, %p145
      %p147 = scmp.ne.s32.totalorder %s133, %s134
      %p148 = scmp.eq.s32.totalorder %s23, 1
      %p149 = por %p147, %p148
      %p151 = scmp.ne.s32.totalorder %s134, %s150
      %p152 = scmp.eq.s32.totalorder %s23, 0
      %p153 = por %p151, %p152
      %s154 = ssub.s32 %s24, %s43
      %s155 = ssub.s32 %s25, %s39
      %s156 = sor.u32 %s154, %s155
      %s157 = ssub.s32 %s26, %s35
      %s158 = sor.u32 %s156, %s157
      %p159 = scmp.eq.s32.totalorder %s158, 0
      %s161 = sadd.s32 %s160, 1
      %s162 = scalar_select %p159, %s160, %s161
      %p165 = pneg %p159
      %p166 = scmp.eq.s32.totalorder %s17, 1
      %p167 = por %p165, %p166
      %p168 = scmp.ne.s32.totalorder %s160, %s163
      %p169 = scmp.eq.s32.totalorder %s17, 0
      %p170 = por %p168, %p169
      %p171 = scmp.ne.s32.totalorder %s160, %s163
      %p172 = scmp.eq.s32.totalorder %s22, 1
      %p173 = por %p171, %p172
      %p174 = scmp.ne.s32.totalorder %s163, %s164
      %p175 = scmp.eq.s32.totalorder %s22, 0
      %p176 = por %p174, %p175
      %p177 = scmp.ne.s32.totalorder %s163, %s164
      %p178 = scmp.eq.s32.totalorder %s23, 1
      %p179 = por %p177, %p178
      %p181 = scmp.ne.s32.totalorder %s164, %s180
      %p182 = scmp.eq.s32.totalorder %s23, 0
      %p183 = por %p181, %p182
      %p184 = scmp.le.s32.totalorder 1, %s17
      %p185 = scmp.lt.s32.totalorder %s17, 3
      %p186 = pnand %p184, %p185
      %p187 = pneg %p186
      // Predicated region
      $region9: #{tpu_custom_call.1} parent=5 // pred_check
        _
      $region10: #{tpu_custom_call.1} parent=5 // pred_check_branch
        %189 = sbr.rel (%p186) target = $region12
      $region11: #{tpu_custom_call.1} parent=5 // pred_region
        %s190 = ssub.s32 %s17, 1
        // Predicated region
        $region13: #{tpu_custom_call.1} parent=11 // pred_check
          %p191 = pneg %p90
        $region14: #{tpu_custom_call.1} parent=11 // pred_check_branch
          %193 = sbr.rel (%p191) target = $region16
        $region15: #{tpu_custom_call.1} parent=11 // pred_region
          %s195 = ssub.s32 512, 512
          %196 = vsyncadd [#allocation6], %s195
          %s197 = smul.addr %s29, 128
          %s198 = scalar_lea.hbm %s1, %s197
          %s199 = sshll.u32 [#allocation5], 4
          %s200 = int_to_ptr.vmem [resolvable:$true] %s199
          %205 = dma.hbm_to_vmem [thread:$0]  %s198, 512, %s200, [#allocation6], 128, 128, 8
        $region16: #{tpu_custom_call.1} parent=11 // pred_fallthru
          _
      $region12: #{tpu_custom_call.1} parent=5 // pred_fallthru
        _
      %p206 = scmp.lt.s32.totalorder %s17, 2
      // Predicated region
      $region17: #{tpu_custom_call.1} parent=5 // pred_check
        %p207 = pneg %p206
      $region18: #{tpu_custom_call.1} parent=5 // pred_check_branch
        %209 = sbr.rel (%p207) target = $region20
      $region19: #{tpu_custom_call.1} parent=5 // pred_region
        // Predicated region
        $region21: #{tpu_custom_call.1} parent=19 // pred_check
          %p210 = pneg %p58
        $region22: #{tpu_custom_call.1} parent=19 // pred_check_branch
          %212 = sbr.rel (%p210) target = $region24
        $region23: #{tpu_custom_call.1} parent=19 // pred_region
          %s213 = sand.u32 %s48, 1
          %s214 = scalar_lea.sflag [#allocation3], %s213
          %s215 = sand.u32 %s48, 1
          %s216 = smul.addr %s215, 16
          %s217 = scalar_lea.vmem [#allocation2], %s216
          %s218 = smul.u32 2, %s25
          %s220 = ssub.s32 256, 256
          %221 = vsyncadd %s214, %s220
          %s222 = smul.addr %s24, 2
          %s223 = sadd.s32 %s218, %s222
          %s224 = smul.addr %s223, 128
          %s225 = scalar_lea.hbm %s0, %s224
          %s226 = sshll.u32 %s217, 4
          %s227 = int_to_ptr.vmem [resolvable:$true] %s226
          %232 = dma.hbm_to_vmem [thread:$0]  %s225, 256, %s227, %s214, 128, 128, 8
        $region24: #{tpu_custom_call.1} parent=19 // pred_fallthru
          _
        // Predicated region
        $region25: #{tpu_custom_call.1} parent=19 // pred_check
          %p233 = pneg %p112
        $region26: #{tpu_custom_call.1} parent=19 // pred_check_branch
          %235 = sbr.rel (%p233) target = $region28
        $region27: #{tpu_custom_call.1} parent=19 // pred_region
          %p236 = scmp.lt.s32.totalorder %s24, 1
          %s237 = scalar_select %p236, %s24, 1
          %p238 = scmp.lt.s32.totalorder %s26, 0
          %s239 = scalar_select %p238, %s26, 0
          %s240 = sadd.s32 %s239, %s237
          %s241 = scalar_lea.vmem %s2, %s240
        $region28: #{tpu_custom_call.1} parent=19 // pred_fallthru
          _
        // Predicated region
        $region29: #{tpu_custom_call.1} parent=19 // pred_check
          %p242 = pneg %p140
        $region30: #{tpu_custom_call.1} parent=19 // pred_check_branch
          %244 = sbr.rel (%p242) target = $region32
        $region31: #{tpu_custom_call.1} parent=19 // pred_region
          %p245 = scmp.lt.s32.totalorder %s24, 1
          %s246 = scalar_select %p245, %s24, 1
          %p247 = scmp.lt.s32.totalorder %s26, 0
          %s248 = scalar_select %p247, %s26, 0
          %s249 = sadd.s32 %s248, %s246
          %s250 = scalar_lea.vmem %s3, %s249
        $region32: #{tpu_custom_call.1} parent=19 // pred_fallthru
          _
      $region20: #{tpu_custom_call.1} parent=5 // pred_fallthru
        _
      %p251 = scmp.le.s32.totalorder 1, %s17
      %p252 = scmp.lt.s32.totalorder %s17, 3
      %p253 = pnand %p251, %p252
      %p254 = pneg %p253
      // Predicated region
      $region33: #{tpu_custom_call.1} parent=5 // pred_check
        _
      $region34: #{tpu_custom_call.1} parent=5 // pred_check_branch
        %256 = sbr.rel (%p253) target = $region36
      $region35: #{tpu_custom_call.1} parent=5 // pred_region
        %s257 = ssub.s32 %s17, 1
        %s258 = sand.u32 %s51, 1
        %s259 = scalar_lea.sflag [#allocation3], %s258
        %s260 = sand.u32 %s51, 1
        %s261 = smul.addr %s260, 16
        %s262 = scalar_lea.vmem [#allocation2], %s261
        // Predicated region
        $region37: #{tpu_custom_call.1} parent=35 // pred_check
          %p263 = pneg %p64
        $region38: #{tpu_custom_call.1} parent=35 // pred_check_branch
          %265 = sbr.rel (%p263) target = $region40
        $region39: #{tpu_custom_call.1} parent=35 // pred_region
          %266 = dma.done %s259, 256
        $region40: #{tpu_custom_call.1} parent=35 // pred_fallthru
          _
        // Predicated region
        $region41: #{tpu_custom_call.1} parent=35 // pred_check
          %p267 = pneg %p90
        $region42: #{tpu_custom_call.1} parent=35 // pred_check_branch
          %269 = sbr.rel (%p267) target = $region44
        $region43: #{tpu_custom_call.1} parent=35 // pred_region
          %270 = dma.done [#allocation6], 512
        $region44: #{tpu_custom_call.1} parent=35 // pred_fallthru
          _
        %s271 = sand.u32 %s51, 1
        %s272 = scalar_lea.sflag [#allocation3], %s271
        %s273 = sand.u32 %s51, 1
        %s274 = smul.addr %s273, 16
        %s275 = scalar_lea.vmem [#allocation2], %s274
        %p276 = pneg %p64
        %p277 = pneg %p61
        %p278 = pneg %p90
        %p279 = pneg %p87
        %p280 = scmp.lt.s32.totalorder %s27, 1
        %s281 = scalar_select %p280, %s27, 1
        %p282 = scmp.lt.s32.totalorder %s29, 0
        %s283 = scalar_select %p282, %s29, 0
        %s284 = sadd.s32 %s283, %s281
        %s285 = scalar_lea.vmem %s2, %s284
        %p286 = pneg %p118
        %p287 = pneg %p115
        %p288 = scmp.lt.s32.totalorder %s27, 1
        %s289 = scalar_select %p288, %s27, 1
        %p290 = scmp.lt.s32.totalorder %s29, 0
        %s291 = scalar_select %p290, %s29, 0
        %s292 = sadd.s32 %s291, %s289
        %s293 = scalar_lea.vmem %s3, %s292
        %p294 = pneg %p146
        %p295 = pneg %p143
        %p296 = pneg %p176
        %p297 = pneg %p173
        %s298 = sand.u32 %s163, 1
        %s299 = scalar_lea.sflag [#allocation4], %s298
        %s300 = sand.u32 %s163, 1
        %s301 = smul.addr %s300, 16
        %s302 = scalar_lea.vmem [#allocation7], %s301
        %s303 = smul.u32 2, %s28
        %p304 = scmp.lt.s32.totalorder %s27, 1
        %s305 = scalar_select %p304, %s27, 1
        %p306 = scmp.lt.s32.totalorder %s29, 0
        %s307 = scalar_select %p306, %s29, 0
        %s308 = sadd.s32 %s307, %s305
        %s309 = scalar_lea.vmem %s2, %s308
        %p310 = scmp.lt.s32.totalorder %s27, 1
        %s311 = scalar_select %p310, %s27, 1
        %p312 = scmp.lt.s32.totalorder %s29, 0
        %s313 = scalar_select %p312, %s29, 0
        %s314 = sadd.s32 %s313, %s311
        %s315 = scalar_lea.vmem %s3, %s314
        %s316 = smul.u32 2, %s28
        %v317 = vld [vmem:[%s262] sm:$0xff]
        %v318 = vld [vmem:[%s262 + $0x8] sm:$0xff]
        %v319 = vld [vmem:[#allocation5] sm:$0xff]
        %v320 = vld [vmem:[#allocation5 + $0x8] sm:$0xff]
        %v321 = vld [vmem:[#allocation5 + $0x10] sm:$0xff]
        %v322 = vld [vmem:[#allocation5 + $0x18] sm:$0xff]
        %vm323 = vcmask 261120
        %v325 = vsel %vm323, %v317, 0
        %v328 = vsel %vm323, %v318, 0
        %330 = vmatprep.subr.mxu0 0.0
        %331 = vmatpush1.msra.mxu0 %v319
        %332 = vmatprep.subr.mxu0 0.0
        %333 = vmatpush1.msra.mxu0 %v320
        %334 = vmatprep.subr.mxu0 0.0
        %335 = vmatpush1.msra.mxu0 %v321
        %336 = vmatprep.subr.mxu0 0.0
        %337 = vmatpush1.msra.mxu0 %v322
        %338 = vmatprep.subr.mxu0 0.0
        %339 = vmatpush1.msra.mxu0 0.0
        %340 = vmatprep.subr.mxu0 0.0
        %341 = vmatpush1.msra.mxu0 0.0
        %342 = vmatprep.subr.mxu0 0.0
        %343 = vmatpush1.msra.mxu0 0.0
        %344 = vmatprep.subr.mxu0 0.0
        %345 = vmatpush1.msra.mxu0 0.0
        %346 = vmatprep.subr.mxu0 0.0
        %347 = vmatpush1.msra.mxu0 0.0
        %348 = vmatprep.subr.mxu0 0.0
        %349 = vmatpush1.msra.mxu0 0.0
        %350 = vmatprep.subr.mxu0 0.0
        %351 = vmatpush1.msra.mxu0 0.0
        %352 = vmatprep.subr.mxu0 0.0
        %353 = vmatpush1.msra.mxu0 0.0
        %354 = vmatprep.subr.mxu0 0.0
        %355 = vmatpush1.msra.mxu0 0.0
        %356 = vmatprep.subr.mxu0 0.0
        %357 = vmatpush1.msra.mxu0 0.0
        %358 = vmatprep.subr.mxu0 0.0
        %359 = vmatpush1.msra.mxu0 0.0
        %360 = vmatprep.subr.mxu0 0.0
        %361 = vmatpush1.msra.mxu0 0.0
        %362 = vmatprep.subr.mxu0 0.0
        %363 = vmatpush1.msra.mxu0 0.0
        %364 = vmatprep.subr.mxu0 0.0
        %365 = vmatpush1.msra.mxu0 0.0
        %366 = vmatprep.subr.mxu0 0.0
        %367 = vmatpush1.msra.mxu0 0.0
        %368 = vmatprep.subr.mxu0 0.0
        %369 = vmatpush1.msra.mxu0 0.0
        %370 = vmatprep.subr.mxu0 0.0
        %371 = vmatpush1.msra.mxu0 0.0
        %372 = vmatprep.subr.mxu0 0.0
        %373 = vmatpush1.msra.mxu0 0.0
        %374 = vmatprep.subr.mxu0 0.0
        %375 = vmatpush1.msra.mxu0 0.0
        %376 = vmatprep.subr.mxu0 0.0
        %377 = vmatpush1.msra.mxu0 0.0
        %378 = vmatprep.subr.mxu0 0.0
        %379 = vmatpush1.msra.mxu0 0.0
        %380 = vmatprep.subr.mxu0 0.0
        %381 = vmatpush1.msra.mxu0 0.0
        %382 = vmatprep.subr.mxu0 0.0
        %383 = vmatpush1.msra.mxu0 0.0
        %384 = vmatprep.subr.mxu0 0.0
        %385 = vmatpush1.msra.mxu0 0.0
        %386 = vmatprep.subr.mxu0 0.0
        %387 = vmatpush1.msra.mxu0 0.0
        %388 = vmatprep.subr.mxu0 0.0
        %389 = vmatpush1.msra.mxu0 0.0
        %390 = vmatprep.subr.mxu0 0.0
        %391 = vmatpush1.msra.mxu0 0.0
        %392 = vmatprep.subr.mxu0 0.0
        %393 = vmatpush1.msra.mxu0 0.0
        %394 = vmatprep.mubr.f32.mxu0 0.0
        %395 = vmatmul.mubr.f32.gmra.mrb[0].mxu0 %v325
        %v396 = vpop.f32.mrb[0].mxu0
        %v397 = vadd.f32 0.0, %v396
        %v398 = vpop.f32.mrb[0].mxu0
        %399 = vmatprep.mubr.f32.mxu0 0.0
        %400 = vmatmul.mubr.f32.gmra.mrb[0].mxu0 %v328
        %v401 = vpop.f32.mrb[0].mxu0
        %v402 = vadd.f32 0.0, %v401
        %v403 = vpop.f32.mrb[0].mxu0
        %404 = vdwg.mxu0
        %v405 = vld [vmem:[%s309] sm:$0x1]
        %v407 = vlaneseq
        %v408 = vshrl.u32 %v407, 7
        %v409 = vsub.s32 0, %v408
        %v410 = vrot.slane %v405, %v409
        %v412 = vmul.f32 %v397, %v410
        %v413 = vmul.f32 %v402, %v410
        %v414 = vld [vmem:[%s315] sm:$0x1]
        %v416 = vlaneseq
        %v417 = vshrl.u32 %v416, 7
        %v418 = vsub.s32 0, %v417
        %v419 = vrot.slane %v414, %v418
        %v421 = vadd.f32 %v412, %v419
        %v422 = vadd.f32 %v413, %v419
        %423 = vst [vmem:[%s302] sm:$0xff] %v421
        %424 = vst [vmem:[%s302 + $0x8] sm:$0xff] %v422
        %s425 = sand.u32 %s163, 1
        %s426 = scalar_lea.sflag [#allocation4], %s425
        %s427 = sand.u32 %s163, 1
        %s428 = smul.addr %s427, 16
        %s429 = scalar_lea.vmem [#allocation7], %s428
        // Predicated region
        $region45: #{tpu_custom_call.1} parent=35 // pred_check
          %p430 = pneg %p173
        $region46: #{tpu_custom_call.1} parent=35 // pred_check_branch
          %432 = sbr.rel (%p430) target = $region48
        $region47: #{tpu_custom_call.1} parent=35 // pred_region
          %s433 = smul.u32 2, %s28
          %s435 = ssub.s32 256, 256
          %436 = vsyncadd %s426, %s435
          %s437 = sadd.s32 %s29, %s433
          %s438 = smul.addr %s27, 2
          %s439 = sadd.s32 %s437, %s438
          %s440 = smul.addr %s439, 128
          %s441 = scalar_lea.hbm %s4, %s440
          %s442 = sshll.u32 %s429, 4
          %s443 = int_to_ptr.vmem [resolvable:$true] %s442
          %448 = dma.vmem_to_hbm [thread:$0]  %s443, 256, %s441, %s426, 128, 128, 8
        $region48: #{tpu_custom_call.1} parent=35 // pred_fallthru
          _
      $region36: #{tpu_custom_call.1} parent=5 // pred_fallthru
        _
      %p449 = scmp.le.s32.totalorder 2, %s17
      // Predicated region
      $region49: #{tpu_custom_call.1} parent=5 // pred_check
        %p450 = pneg %p449
      $region50: #{tpu_custom_call.1} parent=5 // pred_check_branch
        %452 = sbr.rel (%p450) target = $region52
      $region51: #{tpu_custom_call.1} parent=5 // pred_region
        %s453 = ssub.s32 %s17, 2
        // Predicated region
        $region53: #{tpu_custom_call.1} parent=51 // pred_check
          %p454 = pneg %p179
        $region54: #{tpu_custom_call.1} parent=51 // pred_check_branch
          %456 = sbr.rel (%p454) target = $region56
        $region55: #{tpu_custom_call.1} parent=51 // pred_region
          %s457 = sand.u32 %s164, 1
          %s458 = scalar_lea.sflag [#allocation4], %s457
          %s459 = sand.u32 %s164, 1
          %s460 = smul.addr %s459, 16
          %s461 = scalar_lea.vmem [#allocation7], %s460
          %462 = dma.done %s458, 256
        $region56: #{tpu_custom_call.1} parent=51 // pred_fallthru
          _
      $region52: #{tpu_custom_call.1} parent=5 // pred_fallthru
        _
    $region6: #{tpu_custom_call.1} parent=1 // loop_footer
      %s21 = sadd.s32 1, %s17
    $region7: #{tpu_custom_call.1} parent=1 // loop_footer_branch
      %16 = sbr.rel target = $region3
    $region8: #{tpu_custom_call.1} parent=1 // loop_exit
      _
    %463 = vsyncpa [#allocation3], 1
    %s464 = scalar_lea.sflag [#allocation3], 1
    %465 = vsyncpa %s464, 1
    %466 = vsyncpa [#allocation6], 1
    %467 = vsyncpa [#allocation4], 1
    %s468 = scalar_lea.sflag [#allocation4], 1
    %469 = vsyncpa %s468, 1

</llo_original>
